<compile_context>
chip_gen: v6e
topology: v6e:2x2x1
jax: 0.10.0
libtpu: 0.0.40
codegen_flags: <defaults>
</compile_context>

<pallas_src>
import functools

import jax
import jax.numpy as jnp
import numpy as np
from jax.experimental import pallas as pl
from jax.experimental.pallas import tpu as pltpu


def _round_up(a, m):
    return (a + m - 1) // m * m


def _kmax_cell_kernel(x_ref, w1_ref, b1_ref, w2_ref, b2_ref, wf_ref, bf_ref,
                      emb_ref, prob_ref, *, k):
    x = x_ref[...]                                        # (TN, E) f32
    TN, E = x.shape

    # ---------------- Router MLP: Linear -> ReLU -> Linear -> tanh -> relu --
    h = jnp.maximum(
        jnp.dot(x, w1_ref[...], preferred_element_type=jnp.float32) + b1_ref[...],
        0.0)
    logits = jnp.dot(h, w2_ref[...], preferred_element_type=jnp.float32) + b2_ref[...]
    prob_ref[...] = jnp.maximum(jnp.tanh(logits), 0.0)    # (TN, P)

    # ---------------- k-max pooling along last dim, original order kept -----
    # Exact: lowest-index-first among tied maxima, matching lax.top_k.
    iota = jax.lax.broadcasted_iota(jnp.int32, (TN, E), 1)
    work = x
    vals = []
    idxs = []
    for _ in range(k):                                    # k is small & static
        m = jnp.max(work, axis=-1, keepdims=True)         # (TN, 1)   XLU reduce
        hit = work == m
        idx = jnp.min(jnp.where(hit, iota, E), axis=-1, keepdims=True)  # first argmax
        vals.append(m)
        idxs.append(idx)
        work = jnp.where(iota == idx, -jnp.inf, work)

    # Sort the (index, value) pairs ascending by index (tiny bubble network, VPU).
    for i in range(k):
        for j in range(k - 1 - i):
            swap = idxs[j] > idxs[j + 1]
            idxs[j], idxs[j + 1] = (jnp.where(swap, idxs[j + 1], idxs[j]),
                                    jnp.where(swap, idxs[j], idxs[j + 1]))
            vals[j], vals[j + 1] = (jnp.where(swap, vals[j + 1], vals[j]),
                                    jnp.where(swap, vals[j], vals[j + 1]))

    # ---------------- fc as k rank-1 updates (VPU; MXU has slack anyway) -----
    wf = wf_ref[...]                                      # (k, O)
    acc = vals[0] * wf[0:1, :] + bf_ref[...]              # seed: first term + bias
    for j in range(1, k):
        acc = acc + vals[j] * wf[j:j + 1, :]
    emb_ref[...] = acc                                    # (TN, O)


def k_maxpooling_cell(x, params, *, k, row_tile=1024, min_steps=4):
    """x: (B, S, E) float32.  Returns (emb (B,S,O), path_prob (B,S,P)).

    row_tile: target rows per grid step (sweep 512/1024/2048 on real shapes).
    min_steps: lower bound on grid steps (when N permits) so the parallel row
    axis can be split across the two TensorCores on v7x.
    """
    w1, b1, w2, b2, wf, bf = params
    B, S, E = x.shape
    H = w1.shape[1]
    P = w2.shape[1]
    O = wf.shape[1]

    N = B * S
    x2 = x.reshape(N, E)                                  # free reshape (row-major)

    # Balanced ragged tiling: no jnp.pad copy of x, small tail waste, >=2 steps.
    nsteps = max(min_steps, pl.cdiv(N, row_tile))
    nsteps = max(1, min(nsteps, pl.cdiv(N, 8)))
    tile = _round_up(pl.cdiv(N, nsteps), 8)
    grid = pl.cdiv(N, tile)

    kernel = functools.partial(_kmax_cell_kernel, k=k)
    emb, prob = pl.pallas_call(
        kernel,
        out_shape=(jax.ShapeDtypeStruct((N, O), jnp.float32),
                   jax.ShapeDtypeStruct((N, P), jnp.float32)),
        grid=(grid,),
        in_specs=[
            pl.BlockSpec((tile, E), lambda i: (i, 0)),    # x rows (ragged last block)
            pl.BlockSpec((E, H), lambda i: (0, 0)),       # W1
            pl.BlockSpec((1, H), lambda i: (0, 0)),       # b1
            pl.BlockSpec((H, P), lambda i: (0, 0)),       # W2
            pl.BlockSpec((1, P), lambda i: (0, 0)),       # b2
            pl.BlockSpec((k, O), lambda i: (0, 0)),       # Wfc
            pl.BlockSpec((1, O), lambda i: (0, 0)),       # bfc
        ],
        out_specs=(pl.BlockSpec((tile, O), lambda i: (i, 0)),
                   pl.BlockSpec((tile, P), lambda i: (i, 0))),
        compiler_params=pltpu.CompilerParams(
            dimension_semantics=("parallel",),            # megacore sharding on v7x
            vmem_limit_bytes=32 * 1024 * 1024),           # explicit; tiles use <1 MiB
    )(x2, w1, b1, w2, b2, wf, bf)

    return emb.reshape(B, S, O), prob.reshape(B, S, P)


def init_params(key, embed_size, hid_router, num_out_path, k, out_dim):
    """Deterministic synthetic parameters (shapes match the torch module)."""
    k1, k2, k3, k4, k5 = jax.random.split(key, 5)
    w1 = jax.random.normal(k1, (embed_size, hid_router), jnp.float32) * 0.05
    b1 = jax.random.normal(k2, (1, hid_router), jnp.float32) * 0.05
    w2 = jax.random.normal(k3, (hid_router, num_out_path), jnp.float32) * 0.05
    b2 = jnp.full((1, num_out_path), 1.5, jnp.float32)     # Router.init_weights()
    wf = jax.random.normal(k4, (k, out_dim), jnp.float32) * 0.05
    bf = jax.random.normal(k5, (1, out_dim), jnp.float32) * 0.05
    return (w1, b1, w2, b2, wf, bf)


def _ref_forward(x, params, k):
    """Pure-JAX reference mirroring the torch module."""
    w1, b1, w2, b2, wf, bf = params
    h = jnp.maximum(x @ w1 + b1, 0.0)
    prob = jnp.maximum(jnp.tanh(h @ w2 + b2), 0.0)
    _, idx = jax.lax.top_k(x, k)
    idx_sorted = jnp.sort(idx, axis=-1)
    kmax = jnp.take_along_axis(x, idx_sorted, axis=-1)
    emb = kmax @ wf + bf
    return emb, prob


if __name__ == "__main__":
    # small shapes: batch=2, seq=8, embed=32, hid=16, num_out_path=4, k=3, out=64
    B, S, E = 2, 8, 32
    hid_router, num_out_path, k, out_dim = 16, 4, 3, 64

    key = jax.random.PRNGKey(0)
    kx, kp, kx2, kx3 = jax.random.split(key, 4)
    x = jax.random.normal(kx, (B, S, E), jnp.float32)
    params = init_params(kp, E, hid_router, num_out_path, k, out_dim)

    # 1) basic correctness at the small demo shape (N=16 -> tile=8, grid=2)
    emb, path_prob = k_maxpooling_cell(x, params, k=k)
    jax.block_until_ready((emb, path_prob))
    emb_ref, prob_ref = _ref_forward(x, params, k)
    assert emb.shape == (B, S, out_dim) and path_prob.shape == (B, S, num_out_path)
    np.testing.assert_allclose(np.asarray(emb), np.asarray(emb_ref), rtol=1e-5, atol=1e-5)
    np.testing.assert_allclose(np.asarray(path_prob), np.asarray(prob_ref), rtol=1e-5, atol=1e-5)

    # 2) tie handling: quantized inputs create repeated maxima within rows;
    #    kernel must match lax.top_k's lowest-index-first convention exactly.
    x_tie = jnp.round(x * 4.0) / 4.0
    emb_t, prob_t = k_maxpooling_cell(x_tie, params, k=k)
    emb_tr, prob_tr = _ref_forward(x_tie, params, k)
    np.testing.assert_allclose(np.asarray(emb_t), np.asarray(emb_tr), rtol=1e-5, atol=1e-5)
    np.testing.assert_allclose(np.asarray(prob_t), np.asarray(prob_tr), rtol=1e-5, atol=1e-5)

    # 3) multi-step balanced grid (N=400, row_tile=128 -> nsteps=4, tile=104,
    #    grid=4, ragged last block with 88 valid rows of 104)
    B2, S2 = 4, 100
    x_big = jax.random.normal(kx2, (B2, S2, E), jnp.float32)
    emb_b, prob_b = k_maxpooling_cell(x_big, params, k=k, row_tile=128)
    emb_br, prob_br = _ref_forward(x_big, params, k)
    np.testing.assert_allclose(np.asarray(emb_b), np.asarray(emb_br), rtol=1e-5, atol=1e-5)
    np.testing.assert_allclose(np.asarray(prob_b), np.asarray(prob_br), rtol=1e-5, atol=1e-5)

    # 4) N not a multiple of 8 (N=21 -> tile=8, grid=3, last block 5 valid rows)
    B3, S3 = 3, 7
    x_odd = jax.random.normal(kx3, (B3, S3, E), jnp.float32)
    emb_o, prob_o = k_maxpooling_cell(x_odd, params, k=k)
    emb_or, prob_or = _ref_forward(x_odd, params, k)
    np.testing.assert_allclose(np.asarray(emb_o), np.asarray(emb_or), rtol=1e-5, atol=1e-5)
    np.testing.assert_allclose(np.asarray(prob_o), np.asarray(prob_or), rtol=1e-5, atol=1e-5)

    jax.block_until_ready((emb_t, prob_t, emb_b, prob_b, emb_o, prob_o))
    print("KERNEL_OK")
</pallas_src>

<mosaic_0001>
module attributes {stable_mosaic.version = 11 : i64} {
  func.func @_kmax_cell_kernel(%arg0: i32, %arg1: memref<8x32xf32, #tpu.memory_space<vmem>>, %arg2: memref<32x16xf32, #tpu.memory_space<vmem>>, %arg3: memref<1x16xf32, #tpu.memory_space<vmem>>, %arg4: memref<16x4xf32, #tpu.memory_space<vmem>>, %arg5: memref<1x4xf32, #tpu.memory_space<vmem>>, %arg6: memref<3x64xf32, #tpu.memory_space<vmem>>, %arg7: memref<1x64xf32, #tpu.memory_space<vmem>>, %arg8: memref<8x64xf32, #tpu.memory_space<vmem>>, %arg9: memref<8x4xf32, #tpu.memory_space<vmem>>) attributes {dimension_semantics = [#tpu.dimension_semantics<parallel>], iteration_bounds = array<i64: 2>, scalar_prefetch = 0 : i64, scratch_operands = 0 : i64, tpu.core_type = #tpu.core_type<tc>, window_params = [{transform_indices = @transform_0, window_bounds = array<i64: 8, 32>}, {pipeline_mode = #tpu.pipeline_mode<synchronous>, transform_indices = @transform_1, window_bounds = array<i64: 32, 16>}, {pipeline_mode = #tpu.pipeline_mode<synchronous>, transform_indices = @transform_2, window_bounds = array<i64: 1, 16>}, {pipeline_mode = #tpu.pipeline_mode<synchronous>, transform_indices = @transform_3, window_bounds = array<i64: 16, 4>}, {pipeline_mode = #tpu.pipeline_mode<synchronous>, transform_indices = @transform_4, window_bounds = array<i64: 1, 4>}, {pipeline_mode = #tpu.pipeline_mode<synchronous>, transform_indices = @transform_5, window_bounds = array<i64: 3, 64>}, {pipeline_mode = #tpu.pipeline_mode<synchronous>, transform_indices = @transform_6, window_bounds = array<i64: 1, 64>}, {transform_indices = @transform_7, window_bounds = array<i64: 8, 64>}, {transform_indices = @transform_8, window_bounds = array<i64: 8, 4>}]} {
    %c0 = arith.constant 0 : index
    %c0_0 = arith.constant 0 : index
    %0 = vector.load %arg1[%c0, %c0_0] : memref<8x32xf32, #tpu.memory_space<vmem>>, vector<8x32xf32>
    %c0_1 = arith.constant 0 : index
    %c0_2 = arith.constant 0 : index
    %1 = vector.load %arg2[%c0_1, %c0_2] : memref<32x16xf32, #tpu.memory_space<vmem>>, vector<32x16xf32>
    %cst = arith.constant dense<0.000000e+00> : vector<8x16xf32>
    %2 = tpu.matmul %0, %1, %cst {dimension_numbers = #tpu.dot_dimension_numbers<[1], [0], [0], [1], [0, 0, 1, 1], [], []>} : vector<8x32xf32>, vector<32x16xf32>, vector<8x16xf32> -> vector<8x16xf32>
    %c0_3 = arith.constant 0 : index
    %c0_4 = arith.constant 0 : index
    %3 = vector.load %arg3[%c0_3, %c0_4] : memref<1x16xf32, #tpu.memory_space<vmem>>, vector<1x16xf32>
    %4 = vector.broadcast %3 : vector<1x16xf32> to vector<8x16xf32>
    %5 = arith.addf %2, %4 : vector<8x16xf32>
    %cst_5 = arith.constant 0.000000e+00 : f32
    %6 = vector.broadcast %cst_5 : f32 to vector<8x16xf32>
    %7 = arith.maximumf %5, %6 : vector<8x16xf32>
    %c0_6 = arith.constant 0 : index
    %c0_7 = arith.constant 0 : index
    %8 = vector.load %arg4[%c0_6, %c0_7] : memref<16x4xf32, #tpu.memory_space<vmem>>, vector<16x4xf32>
    %cst_8 = arith.constant dense<0.000000e+00> : vector<8x4xf32>
    %9 = tpu.matmul %7, %8, %cst_8 {dimension_numbers = #tpu.dot_dimension_numbers<[1], [0], [0], [1], [0, 0, 1, 1], [], []>} : vector<8x16xf32>, vector<16x4xf32>, vector<8x4xf32> -> vector<8x4xf32>
    %c0_9 = arith.constant 0 : index
    %c0_10 = arith.constant 0 : index
    %10 = vector.load %arg5[%c0_9, %c0_10] : memref<1x4xf32, #tpu.memory_space<vmem>>, vector<1x4xf32>
    %11 = vector.broadcast %10 : vector<1x4xf32> to vector<8x4xf32>
    %12 = arith.addf %9, %11 : vector<8x4xf32>
    %13 = math.tanh %12 : vector<8x4xf32>
    %cst_11 = arith.constant 0.000000e+00 : f32
    %14 = vector.broadcast %cst_11 : f32 to vector<8x4xf32>
    %15 = arith.maximumf %13, %14 : vector<8x4xf32>
    %c0_12 = arith.constant 0 : index
    %c0_13 = arith.constant 0 : index
    %16 = vector.load %arg9[%c0_12, %c0_13] : memref<8x4xf32, #tpu.memory_space<vmem>>, vector<8x4xf32>
    tpu.vector_store %arg9[%c0_12, %c0_13], %15 {strides = array<i32>} : memref<8x4xf32, #tpu.memory_space<vmem>>, vector<8x4xf32>,
    %17 = tpu.iota {dimensions = array<i32: 1>} : vector<8x32xi32>
    %cst_14 = arith.constant dense<0xFF800000> : vector<8xf32>
    %18 = vector.multi_reduction <maximumf>, %0, %cst_14 [1] : vector<8x32xf32> to vector<8xf32>
    %19 = vector.shape_cast %18 : vector<8xf32> to vector<8x1xf32>
    %20 = vector.broadcast %19 : vector<8x1xf32> to vector<8x32xf32>
    %21 = arith.cmpf oeq, %0, %20 : vector<8x32xf32>
    %c32_i32 = arith.constant 32 : i32
    %22 = vector.broadcast %c32_i32 : i32 to vector<8x32xi32>
    %23 = arith.select %21, %17, %22 : vector<8x32xi1>, vector<8x32xi32>
    %cst_15 = arith.constant dense<2147483647> : vector<8xi32>
    %24 = vector.multi_reduction <minsi>, %23, %cst_15 [1] : vector<8x32xi32> to vector<8xi32>
    %25 = vector.shape_cast %24 : vector<8xi32> to vector<8x1xi32>
    %26 = vector.broadcast %25 : vector<8x1xi32> to vector<8x32xi32>
    %27 = arith.cmpi eq, %17, %26 : vector<8x32xi32>
    %cst_16 = arith.constant 0xFF800000 : f32
    %28 = vector.broadcast %cst_16 : f32 to vector<8x32xf32>
    %29 = arith.select %27, %28, %0 : vector<8x32xi1>, vector<8x32xf32>
    %cst_17 = arith.constant dense<0xFF800000> : vector<8xf32>
    %30 = vector.multi_reduction <maximumf>, %29, %cst_17 [1] : vector<8x32xf32> to vector<8xf32>
    %31 = vector.shape_cast %30 : vector<8xf32> to vector<8x1xf32>
    %32 = vector.broadcast %31 : vector<8x1xf32> to vector<8x32xf32>
    %33 = arith.cmpf oeq, %29, %32 : vector<8x32xf32>
    %c32_i32_18 = arith.constant 32 : i32
    %34 = vector.broadcast %c32_i32_18 : i32 to vector<8x32xi32>
    %35 = arith.select %33, %17, %34 : vector<8x32xi1>, vector<8x32xi32>
    %cst_19 = arith.constant dense<2147483647> : vector<8xi32>
    %36 = vector.multi_reduction <minsi>, %35, %cst_19 [1] : vector<8x32xi32> to vector<8xi32>
    %37 = vector.shape_cast %36 : vector<8xi32> to vector<8x1xi32>
    %38 = vector.broadcast %37 : vector<8x1xi32> to vector<8x32xi32>
    %39 = arith.cmpi eq, %17, %38 : vector<8x32xi32>
    %cst_20 = arith.constant 0xFF800000 : f32
    %40 = vector.broadcast %cst_20 : f32 to vector<8x32xf32>
    %41 = arith.select %39, %40, %29 : vector<8x32xi1>, vector<8x32xf32>
    %cst_21 = arith.constant dense<0xFF800000> : vector<8xf32>
    %42 = vector.multi_reduction <maximumf>, %41, %cst_21 [1] : vector<8x32xf32> to vector<8xf32>
    %43 = vector.shape_cast %42 : vector<8xf32> to vector<8x1xf32>
    %44 = vector.broadcast %43 : vector<8x1xf32> to vector<8x32xf32>
    %45 = arith.cmpf oeq, %41, %44 : vector<8x32xf32>
    %c32_i32_22 = arith.constant 32 : i32
    %46 = vector.broadcast %c32_i32_22 : i32 to vector<8x32xi32>
    %47 = arith.select %45, %17, %46 : vector<8x32xi1>, vector<8x32xi32>
    %cst_23 = arith.constant dense<2147483647> : vector<8xi32>
    %48 = vector.multi_reduction <minsi>, %47, %cst_23 [1] : vector<8x32xi32> to vector<8xi32>
    %49 = vector.shape_cast %48 : vector<8xi32> to vector<8x1xi32>
    %50 = arith.cmpi sgt, %25, %37 : vector<8x1xi32>
    %51 = arith.select %50, %37, %25 : vector<8x1xi1>, vector<8x1xi32>
    %52 = arith.select %50, %25, %37 : vector<8x1xi1>, vector<8x1xi32>
    %53 = arith.select %50, %31, %19 : vector<8x1xi1>, vector<8x1xf32>
    %54 = arith.select %50, %19, %31 : vector<8x1xi1>, vector<8x1xf32>
    %55 = arith.cmpi sgt, %52, %49 : vector<8x1xi32>
    %56 = arith.select %55, %49, %52 : vector<8x1xi1>, vector<8x1xi32>
    %57 = arith.select %55, %43, %54 : vector<8x1xi1>, vector<8x1xf32>
    %58 = arith.select %55, %54, %43 : vector<8x1xi1>, vector<8x1xf32>
    %59 = arith.cmpi sgt, %51, %56 : vector<8x1xi32>
    %60 = arith.select %59, %57, %53 : vector<8x1xi1>, vector<8x1xf32>
    %61 = arith.select %59, %53, %57 : vector<8x1xi1>, vector<8x1xf32>
    %c0_24 = arith.constant 0 : index
    %c0_25 = arith.constant 0 : index
    %62 = vector.load %arg6[%c0_24, %c0_25] : memref<3x64xf32, #tpu.memory_space<vmem>>, vector<3x64xf32>
    %63 = vector.extract_strided_slice %62 {offsets = [0, 0], sizes = [1, 64], strides = [1, 1]} : vector<3x64xf32> to vector<1x64xf32>
    %64 = vector.broadcast %60 : vector<8x1xf32> to vector<8x64xf32>
    %65 = vector.broadcast %63 : vector<1x64xf32> to vector<8x64xf32>
    %66 = arith.mulf %64, %65 : vector<8x64xf32>
    %c0_26 = arith.constant 0 : index
    %c0_27 = arith.constant 0 : index
    %67 = vector.load %arg7[%c0_26, %c0_27] : memref<1x64xf32, #tpu.memory_space<vmem>>, vector<1x64xf32>
    %68 = vector.broadcast %67 : vector<1x64xf32> to vector<8x64xf32>
    %69 = arith.addf %66, %68 : vector<8x64xf32>
    %70 = vector.extract_strided_slice %62 {offsets = [1, 0], sizes = [1, 64], strides = [1, 1]} : vector<3x64xf32> to vector<1x64xf32>
    %71 = vector.broadcast %61 : vector<8x1xf32> to vector<8x64xf32>
    %72 = vector.broadcast %70 : vector<1x64xf32> to vector<8x64xf32>
    %73 = arith.mulf %71, %72 : vector<8x64xf32>
    %74 = arith.addf %69, %73 : vector<8x64xf32>
    %75 = vector.extract_strided_slice %62 {offsets = [2, 0], sizes = [1, 64], strides = [1, 1]} : vector<3x64xf32> to vector<1x64xf32>
    %76 = vector.broadcast %58 : vector<8x1xf32> to vector<8x64xf32>
    %77 = vector.broadcast %75 : vector<1x64xf32> to vector<8x64xf32>
    %78 = arith.mulf %76, %77 : vector<8x64xf32>
    %79 = arith.addf %74, %78 : vector<8x64xf32>
    %c0_28 = arith.constant 0 : index
    %c0_29 = arith.constant 0 : index
    %80 = vector.load %arg8[%c0_28, %c0_29] : memref<8x64xf32, #tpu.memory_space<vmem>>, vector<8x64xf32>
    tpu.vector_store %arg8[%c0_28, %c0_29], %79 {strides = array<i32>} : memref<8x64xf32, #tpu.memory_space<vmem>>, vector<8x64xf32>,
    return
  }
  func.func @transform_0(%arg0: i32) -> (i32, i32) {
    %c0_i32 = arith.constant 0 : i32
    %c0_i32_0 = arith.constant 0 : i32
    return %arg0, %c0_i32 : i32, i32
  }
  func.func @transform_1(%arg0: i32) -> (i32, i32) {
    %c0_i32 = arith.constant 0 : i32
    %c0_i32_0 = arith.constant 0 : i32
    %c0_i32_1 = arith.constant 0 : i32
    return %c0_i32, %c0_i32_0 : i32, i32
  }
  func.func @transform_2(%arg0: i32) -> (i32, i32) {
    %c0_i32 = arith.constant 0 : i32
    %c0_i32_0 = arith.constant 0 : i32
    %c0_i32_1 = arith.constant 0 : i32
    return %c0_i32, %c0_i32_0 : i32, i32
  }
  func.func @transform_3(%arg0: i32) -> (i32, i32) {
    %c0_i32 = arith.constant 0 : i32
    %c0_i32_0 = arith.constant 0 : i32
    %c0_i32_1 = arith.constant 0 : i32
    return %c0_i32, %c0_i32_0 : i32, i32
  }
  func.func @transform_4(%arg0: i32) -> (i32, i32) {
    %c0_i32 = arith.constant 0 : i32
    %c0_i32_0 = arith.constant 0 : i32
    %c0_i32_1 = arith.constant 0 : i32
    return %c0_i32, %c0_i32_0 : i32, i32
  }
  func.func @transform_5(%arg0: i32) -> (i32, i32) {
    %c0_i32 = arith.constant 0 : i32
    %c0_i32_0 = arith.constant 0 : i32
    %c0_i32_1 = arith.constant 0 : i32
    return %c0_i32, %c0_i32_0 : i32, i32
  }
  func.func @transform_6(%arg0: i32) -> (i32, i32) {
    %c0_i32 = arith.constant 0 : i32
    %c0_i32_0 = arith.constant 0 : i32
    %c0_i32_1 = arith.constant 0 : i32
    return %c0_i32, %c0_i32_0 : i32, i32
  }
  func.func @transform_7(%arg0: i32) -> (i32, i32) {
    %c0_i32 = arith.constant 0 : i32
    %c0_i32_0 = arith.constant 0 : i32
    return %arg0, %c0_i32 : i32, i32
  }
  func.func @transform_8(%arg0: i32) -> (i32, i32) {
    %c0_i32 = arith.constant 0 : i32
    %c0_i32_0 = arith.constant 0 : i32
    return %arg0, %c0_i32 : i32, i32
  }
}

</mosaic_0001>

<llo_original>
// kernel: tpu_custom_call.1
$region0: #{tpu_custom_call.1}
  #allocation0 [shape = 'u32[]', space=smem, size = 0x4, offset = 0x4, fixed_abs, tag = 'smem constant byte address 0x4 - core index']
  #allocation1 [shape = 'u32[144,128]{1,0:T(1,128)}', space=vmem, size = 0x12000, scoped, tag = 'internal scratch']
  %s0 = inlined_call_operand.vmem [shape: f32[16,32], index: 0, kind: input, shape index: {}]
  %s1 = inlined_call_operand.vmem [shape: f32[32,16], index: 1, kind: input, shape index: {}]
  %s2 = inlined_call_operand.vmem [shape: f32[1,16], index: 2, kind: input, shape index: {}]
  %s3 = inlined_call_operand.vmem [shape: f32[16,4], index: 3, kind: input, shape index: {}]
  %s4 = inlined_call_operand.vmem [shape: f32[1,4], index: 4, kind: input, shape index: {}]
  %s5 = inlined_call_operand.vmem [shape: f32[3,64], index: 5, kind: input, shape index: {}]
  %s6 = inlined_call_operand.vmem [shape: f32[1,64], index: 6, kind: input, shape index: {}]
  %s7 = inlined_call_operand.hbm [shape: f32[16,64], index: 7, kind: output, shape index: {0}]
  %s8 = inlined_call_operand.vmem [shape: f32[16,4], index: 8, kind: output, shape index: {1}]
  %9 = xla_tuple %s7, %s8
  %s10 = sld [smem:[#allocation0]]
  $region69: #{tpu_custom_call.1} parent=0
    _
  %s12 = ssub.s32 1, %s10
  %s13 = scalar_select 0, %s12, %s10
  $region1: #{tpu_custom_call.1} parent=0
    #allocation2 [shape = 'u8[8192]{0}', space=vmem, size = 0x2000, scoped, tag = 'output window, operand 0']
    #allocation3 [shape = 's32[2]{0}', space=sflag, size = 0x8, scoped, tag = 'scoped memory for tpu_custom_call.1']
    %14 = vsyncpa [#allocation3], 0
    %s15 = scalar_lea.sflag [#allocation3], 1
    %16 = vsyncpa %s15, 0
    loop: start=0, step=1, limit=4
    $region2: #{tpu_custom_call.1} parent=1 // loop_pre_header
      _
    $region3: #{tpu_custom_call.1} parent=1 // loop_header
      %s18 = sphi 0, %s22
      %p19 = scmp.ge.s32.totalorder %s18, 4
      %s28 = sphi 0, %s30
      %s31 = sphi 0, %s28
      %s32 = sphi 0, %s31
      %s48 = sphi 0, %s32
      %s52 = sphi 0, %s52
      %s54 = sphi 0, %s52
      %s55 = sphi 0, %s54
      %s69 = sphi 0, %s55
      %s73 = sphi 0, %s73
      %s75 = sphi 0, %s73
      %s76 = sphi 0, %s75
      %s90 = sphi 0, %s76
      %s94 = sphi 0, %s94
      %s96 = sphi 0, %s94
      %s97 = sphi 0, %s96
      %s111 = sphi 0, %s97
      %s115 = sphi 0, %s115
      %s117 = sphi 0, %s115
      %s118 = sphi 0, %s117
      %s132 = sphi 0, %s118
      %s136 = sphi 0, %s136
      %s138 = sphi 0, %s136
      %s139 = sphi 0, %s138
      %s153 = sphi 0, %s139
      %s157 = sphi 0, %s157
      %s159 = sphi 0, %s157
      %s160 = sphi 0, %s159
      %s174 = sphi 0, %s160
      %s180 = sphi 0, %s182
      %s183 = sphi 0, %s180
      %s184 = sphi 0, %s183
      %s200 = sphi 0, %s184
      %s206 = sphi 0, %s208
      %s209 = sphi 0, %s206
      %s210 = sphi 0, %s209
      %s226 = sphi 0, %s210
    $region4: #{tpu_custom_call.1} parent=1 // loop_header_branch
      %21 = sbr.rel (%p19) target = $region8
    $region5: #{tpu_custom_call.1} parent=1 // loop_body
      %s23 = ssub.s32 %s18, 1
      %s24 = ssub.s32 %s18, 2
      %s25 = sadd.s32 %s18, 1
      %s26 = ssub.s32 %s18, %s25
      %p27 = scmp.eq.s32.totalorder %s26, 0
      %s29 = sadd.s32 %s28, 1
      %s30 = scalar_select %p27, %s28, %s29
      %p33 = pneg %p27
      %p34 = scmp.eq.s32.totalorder %s18, 1
      %p35 = por %p33, %p34
      %p36 = scmp.ne.s32.totalorder %s28, %s31
      %p37 = scmp.eq.s32.totalorder %s18, 0
      %p38 = por %p36, %p37
      %p39 = scmp.ne.s32.totalorder %s28, %s31
      %p40 = scmp.eq.s32.totalorder %s23, 1
      %p41 = por %p39, %p40
      %p42 = scmp.ne.s32.totalorder %s31, %s32
      %p43 = scmp.eq.s32.totalorder %s23, 0
      %p44 = por %p42, %p43
      %p45 = scmp.ne.s32.totalorder %s31, %s32
      %p46 = scmp.eq.s32.totalorder %s24, 1
      %p47 = por %p45, %p46
      %p49 = scmp.ne.s32.totalorder %s32, %s48
      %p50 = scmp.eq.s32.totalorder %s24, 0
      %p51 = por %p49, %p50
      %s53 = sadd.s32 %s52, 1
      %p56 = scmp.eq.s32.totalorder %s18, 1
      %p57 = scmp.ne.s32.totalorder %s52, %s54
      %p58 = scmp.eq.s32.totalorder %s18, 0
      %p59 = por %p57, %p58
      %p60 = scmp.ne.s32.totalorder %s52, %s54
      %p61 = scmp.eq.s32.totalorder %s23, 1
      %p62 = por %p60, %p61
      %p63 = scmp.ne.s32.totalorder %s54, %s55
      %p64 = scmp.eq.s32.totalorder %s23, 0
      %p65 = por %p63, %p64
      %p66 = scmp.ne.s32.totalorder %s54, %s55
      %p67 = scmp.eq.s32.totalorder %s24, 1
      %p68 = por %p66, %p67
      %p70 = scmp.ne.s32.totalorder %s55, %s69
      %p71 = scmp.eq.s32.totalorder %s24, 0
      %p72 = por %p70, %p71
      %s74 = sadd.s32 %s73, 1
      %p77 = scmp.eq.s32.totalorder %s18, 1
      %p78 = scmp.ne.s32.totalorder %s73, %s75
      %p79 = scmp.eq.s32.totalorder %s18, 0
      %p80 = por %p78, %p79
      %p81 = scmp.ne.s32.totalorder %s73, %s75
      %p82 = scmp.eq.s32.totalorder %s23, 1
      %p83 = por %p81, %p82
      %p84 = scmp.ne.s32.totalorder %s75, %s76
      %p85 = scmp.eq.s32.totalorder %s23, 0
      %p86 = por %p84, %p85
      %p87 = scmp.ne.s32.totalorder %s75, %s76
      %p88 = scmp.eq.s32.totalorder %s24, 1
      %p89 = por %p87, %p88
      %p91 = scmp.ne.s32.totalorder %s76, %s90
      %p92 = scmp.eq.s32.totalorder %s24, 0
      %p93 = por %p91, %p92
      %s95 = sadd.s32 %s94, 1
      %p98 = scmp.eq.s32.totalorder %s18, 1
      %p99 = scmp.ne.s32.totalorder %s94, %s96
      %p100 = scmp.eq.s32.totalorder %s18, 0
      %p101 = por %p99, %p100
      %p102 = scmp.ne.s32.totalorder %s94, %s96
      %p103 = scmp.eq.s32.totalorder %s23, 1
      %p104 = por %p102, %p103
      %p105 = scmp.ne.s32.totalorder %s96, %s97
      %p106 = scmp.eq.s32.totalorder %s23, 0
      %p107 = por %p105, %p106
      %p108 = scmp.ne.s32.totalorder %s96, %s97
      %p109 = scmp.eq.s32.totalorder %s24, 1
      %p110 = por %p108, %p109
      %p112 = scmp.ne.s32.totalorder %s97, %s111
      %p113 = scmp.eq.s32.totalorder %s24, 0
      %p114 = por %p112, %p113
      %s116 = sadd.s32 %s115, 1
      %p119 = scmp.eq.s32.totalorder %s18, 1
      %p120 = scmp.ne.s32.totalorder %s115, %s117
      %p121 = scmp.eq.s32.totalorder %s18, 0
      %p122 = por %p120, %p121
      %p123 = scmp.ne.s32.totalorder %s115, %s117
      %p124 = scmp.eq.s32.totalorder %s23, 1
      %p125 = por %p123, %p124
      %p126 = scmp.ne.s32.totalorder %s117, %s118
      %p127 = scmp.eq.s32.totalorder %s23, 0
      %p128 = por %p126, %p127
      %p129 = scmp.ne.s32.totalorder %s117, %s118
      %p130 = scmp.eq.s32.totalorder %s24, 1
      %p131 = por %p129, %p130
      %p133 = scmp.ne.s32.totalorder %s118, %s132
      %p134 = scmp.eq.s32.totalorder %s24, 0
      %p135 = por %p133, %p134
      %s137 = sadd.s32 %s136, 1
      %p140 = scmp.eq.s32.totalorder %s18, 1
      %p141 = scmp.ne.s32.totalorder %s136, %s138
      %p142 = scmp.eq.s32.totalorder %s18, 0
      %p143 = por %p141, %p142
      %p144 = scmp.ne.s32.totalorder %s136, %s138
      %p145 = scmp.eq.s32.totalorder %s23, 1
      %p146 = por %p144, %p145
      %p147 = scmp.ne.s32.totalorder %s138, %s139
      %p148 = scmp.eq.s32.totalorder %s23, 0
      %p149 = por %p147, %p148
      %p150 = scmp.ne.s32.totalorder %s138, %s139
      %p151 = scmp.eq.s32.totalorder %s24, 1
      %p152 = por %p150, %p151
      %p154 = scmp.ne.s32.totalorder %s139, %s153
      %p155 = scmp.eq.s32.totalorder %s24, 0
      %p156 = por %p154, %p155
      %s158 = sadd.s32 %s157, 1
      %p161 = scmp.eq.s32.totalorder %s18, 1
      %p162 = scmp.ne.s32.totalorder %s157, %s159
      %p163 = scmp.eq.s32.totalorder %s18, 0
      %p164 = por %p162, %p163
      %p165 = scmp.ne.s32.totalorder %s157, %s159
      %p166 = scmp.eq.s32.totalorder %s23, 1
      %p167 = por %p165, %p166
      %p168 = scmp.ne.s32.totalorder %s159, %s160
      %p169 = scmp.eq.s32.totalorder %s23, 0
      %p170 = por %p168, %p169
      %p171 = scmp.ne.s32.totalorder %s159, %s160
      %p172 = scmp.eq.s32.totalorder %s24, 1
      %p173 = por %p171, %p172
      %p175 = scmp.ne.s32.totalorder %s160, %s174
      %p176 = scmp.eq.s32.totalorder %s24, 0
      %p177 = por %p175, %p176
      %s178 = ssub.s32 %s18, %s25
      %p179 = scmp.eq.s32.totalorder %s178, 0
      %s181 = sadd.s32 %s180, 1
      %s182 = scalar_select %p179, %s180, %s181
      %p185 = pneg %p179
      %p186 = scmp.eq.s32.totalorder %s18, 1
      %p187 = por %p185, %p186
      %p188 = scmp.ne.s32.totalorder %s180, %s183
      %p189 = scmp.eq.s32.totalorder %s18, 0
      %p190 = por %p188, %p189
      %p191 = scmp.ne.s32.totalorder %s180, %s183
      %p192 = scmp.eq.s32.totalorder %s23, 1
      %p193 = por %p191, %p192
      %p194 = scmp.ne.s32.totalorder %s183, %s184
      %p195 = scmp.eq.s32.totalorder %s23, 0
      %p196 = por %p194, %p195
      %p197 = scmp.ne.s32.totalorder %s183, %s184
      %p198 = scmp.eq.s32.totalorder %s24, 1
      %p199 = por %p197, %p198
      %p201 = scmp.ne.s32.totalorder %s184, %s200
      %p202 = scmp.eq.s32.totalorder %s24, 0
      %p203 = por %p201, %p202
      %s204 = ssub.s32 %s18, %s25
      %p205 = scmp.eq.s32.totalorder %s204, 0
      %s207 = sadd.s32 %s206, 1
      %s208 = scalar_select %p205, %s206, %s207
      %p211 = pneg %p205
      %p212 = scmp.eq.s32.totalorder %s18, 1
      %p213 = por %p211, %p212
      %p214 = scmp.ne.s32.totalorder %s206, %s209
      %p215 = scmp.eq.s32.totalorder %s18, 0
      %p216 = por %p214, %p215
      %p217 = scmp.ne.s32.totalorder %s206, %s209
      %p218 = scmp.eq.s32.totalorder %s23, 1
      %p219 = por %p217, %p218
      %p220 = scmp.ne.s32.totalorder %s209, %s210
      %p221 = scmp.eq.s32.totalorder %s23, 0
      %p222 = por %p220, %p221
      %p223 = scmp.ne.s32.totalorder %s209, %s210
      %p224 = scmp.eq.s32.totalorder %s24, 1
      %p225 = por %p223, %p224
      %p227 = scmp.ne.s32.totalorder %s210, %s226
      %p228 = scmp.eq.s32.totalorder %s24, 0
      %p229 = por %p227, %p228
      %p230 = scmp.le.s32.totalorder 1, %s18
      %p231 = scmp.lt.s32.totalorder %s18, 3
      %p232 = pnand %p230, %p231
      %p233 = pneg %p232
      // Predicated region
      $region9: #{tpu_custom_call.1} parent=5 // pred_check
        _
      $region10: #{tpu_custom_call.1} parent=5 // pred_check_branch
        %235 = sbr.rel (%p232) target = $region12
      $region11: #{tpu_custom_call.1} parent=5 // pred_region
        %s236 = ssub.s32 %s18, 1
        // Predicated region
        $region13: #{tpu_custom_call.1} parent=11 // pred_check
          %p237 = pneg %p65
        $region14: #{tpu_custom_call.1} parent=11 // pred_check_branch
          %239 = sbr.rel (%p237) target = $region16
        $region15: #{tpu_custom_call.1} parent=11 // pred_region
          _
        $region16: #{tpu_custom_call.1} parent=11 // pred_fallthru
          _
        // Predicated region
        $region17: #{tpu_custom_call.1} parent=11 // pred_check
          %p240 = pneg %p86
        $region18: #{tpu_custom_call.1} parent=11 // pred_check_branch
          %242 = sbr.rel (%p240) target = $region20
        $region19: #{tpu_custom_call.1} parent=11 // pred_region
          _
        $region20: #{tpu_custom_call.1} parent=11 // pred_fallthru
          _
        // Predicated region
        $region21: #{tpu_custom_call.1} parent=11 // pred_check
          %p243 = pneg %p107
        $region22: #{tpu_custom_call.1} parent=11 // pred_check_branch
          %245 = sbr.rel (%p243) target = $region24
        $region23: #{tpu_custom_call.1} parent=11 // pred_region
          _
        $region24: #{tpu_custom_call.1} parent=11 // pred_fallthru
          _
        // Predicated region
        $region25: #{tpu_custom_call.1} parent=11 // pred_check
          %p246 = pneg %p128
        $region26: #{tpu_custom_call.1} parent=11 // pred_check_branch
          %248 = sbr.rel (%p246) target = $region28
        $region27: #{tpu_custom_call.1} parent=11 // pred_region
          _
        $region28: #{tpu_custom_call.1} parent=11 // pred_fallthru
          _
        // Predicated region
        $region29: #{tpu_custom_call.1} parent=11 // pred_check
          %p249 = pneg %p149
        $region30: #{tpu_custom_call.1} parent=11 // pred_check_branch
          %251 = sbr.rel (%p249) target = $region32
        $region31: #{tpu_custom_call.1} parent=11 // pred_region
          _
        $region32: #{tpu_custom_call.1} parent=11 // pred_fallthru
          _
        // Predicated region
        $region33: #{tpu_custom_call.1} parent=11 // pred_check
          %p252 = pneg %p170
        $region34: #{tpu_custom_call.1} parent=11 // pred_check_branch
          %254 = sbr.rel (%p252) target = $region36
        $region35: #{tpu_custom_call.1} parent=11 // pred_region
          _
        $region36: #{tpu_custom_call.1} parent=11 // pred_fallthru
          _
      $region12: #{tpu_custom_call.1} parent=5 // pred_fallthru
        _
      %p255 = scmp.lt.s32.totalorder %s18, 2
      // Predicated region
      $region37: #{tpu_custom_call.1} parent=5 // pred_check
        %p256 = pneg %p255
      $region38: #{tpu_custom_call.1} parent=5 // pred_check_branch
        %258 = sbr.rel (%p256) target = $region40
      $region39: #{tpu_custom_call.1} parent=5 // pred_region
        // Predicated region
        $region41: #{tpu_custom_call.1} parent=39 // pred_check
          %p259 = pneg %p38
        $region42: #{tpu_custom_call.1} parent=39 // pred_check_branch
          %261 = sbr.rel (%p259) target = $region44
        $region43: #{tpu_custom_call.1} parent=39 // pred_region
          %p262 = scmp.lt.s32.totalorder %s18, 1
          %s263 = scalar_select %p262, %s18, 1
          %s264 = smul.addr %s263, 8
          %s265 = scalar_lea.vmem %s0, %s264
        $region44: #{tpu_custom_call.1} parent=39 // pred_fallthru
          _
      $region40: #{tpu_custom_call.1} parent=5 // pred_fallthru
        _
      %p266 = scmp.le.s32.totalorder 1, %s18
      %p267 = scmp.lt.s32.totalorder %s18, 3
      %p268 = pnand %p266, %p267
      %p269 = pneg %p268
      // Predicated region
      $region45: #{tpu_custom_call.1} parent=5 // pred_check
        _
      $region46: #{tpu_custom_call.1} parent=5 // pred_check_branch
        %271 = sbr.rel (%p268) target = $region48
      $region47: #{tpu_custom_call.1} parent=5 // pred_region
        %s272 = ssub.s32 %s18, 1
        %p273 = scmp.lt.s32.totalorder %s23, 1
        %s274 = scalar_select %p273, %s23, 1
        %s275 = smul.addr %s274, 8
        %s276 = scalar_lea.vmem %s0, %s275
        %p277 = pneg %p44
        %p278 = pneg %p41
        %p279 = pneg %p65
        %p280 = pneg %p62
        %p281 = pneg %p86
        %p282 = pneg %p83
        %p283 = pneg %p107
        %p284 = pneg %p104
        %p285 = pneg %p128
        %p286 = pneg %p125
        %p287 = pneg %p149
        %p288 = pneg %p146
        %p289 = pneg %p170
        %p290 = pneg %p167
        %p291 = pneg %p196
        %p292 = pneg %p193
        %s293 = sand.u32 %s183, 1
        %s294 = scalar_lea.sflag [#allocation3], %s293
        %s295 = sand.u32 %s183, 1
        %s296 = smul.addr %s295, 8
        %s297 = scalar_lea.vmem [#allocation2], %s296
        %p298 = pneg %p222
        %p299 = pneg %p219
        %p300 = scmp.lt.s32.totalorder %s23, 1
        %s301 = scalar_select %p300, %s23, 1
        %s302 = smul.addr %s301, 8
        %s303 = scalar_lea.vmem %s8, %s302
        %p304 = scmp.lt.s32.totalorder %s23, 1
        %s305 = scalar_select %p304, %s23, 1
        %s306 = smul.addr %s305, 8
        %s307 = scalar_lea.vmem %s0, %s306
        %p308 = scmp.lt.s32.totalorder %s23, 1
        %s309 = scalar_select %p308, %s23, 1
        %s310 = smul.addr %s309, 8
        %s311 = scalar_lea.vmem %s8, %s310
        %v312 = vld [vmem:[%s307] sm:$0xff]
        %v313 = vld [vmem:[%s1] sm:$0xff]
        %v314 = vld [vmem:[%s1 + $0x8] sm:$0xff]
        %v315 = vld [vmem:[%s1 + $0x10] sm:$0xff]
        %v316 = vld [vmem:[%s1 + $0x18] sm:$0xff]
        %v317 = vld [vmem:[%s2] sm:$0x1]
        %v319 = vlaneseq
        %v320 = vshrl.u32 %v319, 7
        %v321 = vsub.s32 0, %v320
        %v322 = vrot.slane %v317, %v321
        %vm324 = vcmask 261120
        %v326 = vsel %vm324, %v312, 0
        %328 = vmatprep.subr.mxu0 0.0
        %329 = vmatpush1.msra.mxu0 0.0
        %330 = vmatprep.subr.mxu0 0.0
        %331 = vmatpush1.msra.mxu0 0.0
        %332 = vmatprep.subr.mxu0 0.0
        %333 = vmatpush1.msra.mxu0 0.0
        %334 = vmatprep.subr.mxu0 0.0
        %335 = vmatpush1.msra.mxu0 0.0
        %336 = vmatprep.subr.mxu0 0.0
        %337 = vmatpush1.msra.mxu0 0.0
        %338 = vmatprep.subr.mxu0 0.0
        %339 = vmatpush1.msra.mxu0 0.0
        %340 = vmatprep.subr.mxu0 0.0
        %341 = vmatpush1.msra.mxu0 0.0
        %342 = vmatprep.subr.mxu0 0.0
        %343 = vmatpush1.msra.mxu0 0.0
        %344 = vmatprep.subr.mxu0 0.0
        %345 = vmatpush1.msra.mxu0 0.0
        %346 = vmatprep.subr.mxu0 0.0
        %347 = vmatpush1.msra.mxu0 0.0
        %348 = vmatprep.subr.mxu0 0.0
        %349 = vmatpush1.msra.mxu0 0.0
        %350 = vmatprep.subr.mxu0 0.0
        %351 = vmatpush1.msra.mxu0 0.0
        %352 = vmatprep.subr.mxu0 0.0
        %353 = vmatpush1.msra.mxu0 %v316
        %354 = vmatprep.subr.mxu0 0.0
        %355 = vmatpush1.msra.mxu0 %v315
        %356 = vmatprep.subr.mxu0 0.0
        %357 = vmatpush1.msra.mxu0 %v314
        %358 = vmatprep.subr.mxu0 0.0
        %359 = vmatpush1.msra.mxu0 %v313
        %360 = vmatprep.subr.mxu0 0.0
        %361 = vmatpush2.msra.mxu0 0.0
        %362 = vmatprep.subr.mxu0 0.0
        %363 = vmatpush2.msra.mxu0 0.0
        %364 = vmatprep.subr.mxu0 0.0
        %365 = vmatpush2.msra.mxu0 0.0
        %366 = vmatprep.subr.mxu0 0.0
        %367 = vmatpush2.msra.mxu0 0.0
        %368 = vmatprep.subr.mxu0 0.0
        %369 = vmatpush2.msra.mxu0 0.0
        %370 = vmatprep.subr.mxu0 0.0
        %371 = vmatpush2.msra.mxu0 0.0
        %372 = vmatprep.subr.mxu0 0.0
        %373 = vmatpush2.msra.mxu0 0.0
        %374 = vmatprep.subr.mxu0 0.0
        %375 = vmatpush2.msra.mxu0 0.0
        %376 = vmatprep.subr.mxu0 0.0
        %377 = vmatpush2.msra.mxu0 0.0
        %378 = vmatprep.subr.mxu0 0.0
        %379 = vmatpush2.msra.mxu0 0.0
        %380 = vmatprep.subr.mxu0 0.0
        %381 = vmatpush2.msra.mxu0 0.0
        %382 = vmatprep.subr.mxu0 0.0
        %383 = vmatpush2.msra.mxu0 0.0
        %384 = vmatprep.subr.mxu0 0.0
        %385 = vmatpush2.msra.mxu0 0.0
        %386 = vmatprep.subr.mxu0 0.0
        %387 = vmatpush2.msra.mxu0 0.0
        %388 = vmatprep.subr.mxu0 0.0
        %389 = vmatpush2.msra.mxu0 0.0
        %390 = vmatprep.subr.mxu0 0.0
        %391 = vmatpush2.msra.mxu0 0.0
        %392 = vmatprep.mubr.f32.mxu0 0.0
        %393 = vmatmul.mubr.f32.gmra.mxu0 %v326
        %v394 = vpop.f32.mrf.mxu0
        %v395 = vadd.f32 %v322, %v394
        %v396 = vpop.f32.mrf.mxu0
        %397 = vdwg.mxu0
        %v398 = vmax.f32 %v395, 0.0
        %v399 = vld [vmem:[%s3] sm:$0xff]
        %v400 = vld [vmem:[%s3 + $0x8] sm:$0xff]
        %v401 = vld [vmem:[%s4] sm:$0x1]
        %v403 = vlaneseq
        %v404 = vshrl.u32 %v403, 7
        %v405 = vsub.s32 0, %v404
        %v406 = vrot.slane %v401, %v405
        %vm408 = vcmask 130048
        %v410 = vsel %vm408, %v398, 0
        %412 = vmatprep.subr.mxu0 0.0
        %413 = vmatpush1.msra.mxu0 0.0
        %414 = vmatprep.subr.mxu0 0.0
        %415 = vmatpush1.msra.mxu0 0.0
        %416 = vmatprep.subr.mxu0 0.0
        %417 = vmatpush1.msra.mxu0 0.0
        %418 = vmatprep.subr.mxu0 0.0
        %419 = vmatpush1.msra.mxu0 0.0
        %420 = vmatprep.subr.mxu0 0.0
        %421 = vmatpush1.msra.mxu0 0.0
        %422 = vmatprep.subr.mxu0 0.0
        %423 = vmatpush1.msra.mxu0 0.0
        %424 = vmatprep.subr.mxu0 0.0
        %425 = vmatpush1.msra.mxu0 0.0
        %426 = vmatprep.subr.mxu0 0.0
        %427 = vmatpush1.msra.mxu0 0.0
        %428 = vmatprep.subr.mxu0 0.0
        %429 = vmatpush1.msra.mxu0 0.0
        %430 = vmatprep.subr.mxu0 0.0
        %431 = vmatpush1.msra.mxu0 0.0
        %432 = vmatprep.subr.mxu0 0.0
        %433 = vmatpush1.msra.mxu0 0.0
        %434 = vmatprep.subr.mxu0 0.0
        %435 = vmatpush1.msra.mxu0 0.0
        %436 = vmatprep.subr.mxu0 0.0
        %437 = vmatpush1.msra.mxu0 0.0
        %438 = vmatprep.subr.mxu0 0.0
        %439 = vmatpush1.msra.mxu0 0.0
        %440 = vmatprep.subr.mxu0 0.0
        %441 = vmatpush1.msra.mxu0 %v400
        %442 = vmatprep.subr.mxu0 0.0
        %443 = vmatpush1.msra.mxu0 %v399
        %444 = vmatprep.subr.mxu0 0.0
        %445 = vmatpush2.msra.mxu0 0.0
        %446 = vmatprep.subr.mxu0 0.0
        %447 = vmatpush2.msra.mxu0 0.0
        %448 = vmatprep.subr.mxu0 0.0
        %449 = vmatpush2.msra.mxu0 0.0
        %450 = vmatprep.subr.mxu0 0.0
        %451 = vmatpush2.msra.mxu0 0.0
        %452 = vmatprep.subr.mxu0 0.0
        %453 = vmatpush2.msra.mxu0 0.0
        %454 = vmatprep.subr.mxu0 0.0
        %455 = vmatpush2.msra.mxu0 0.0
        %456 = vmatprep.subr.mxu0 0.0
        %457 = vmatpush2.msra.mxu0 0.0
        %458 = vmatprep.subr.mxu0 0.0
        %459 = vmatpush2.msra.mxu0 0.0
        %460 = vmatprep.subr.mxu0 0.0
        %461 = vmatpush2.msra.mxu0 0.0
        %462 = vmatprep.subr.mxu0 0.0
        %463 = vmatpush2.msra.mxu0 0.0
        %464 = vmatprep.subr.mxu0 0.0
        %465 = vmatpush2.msra.mxu0 0.0
        %466 = vmatprep.subr.mxu0 0.0
        %467 = vmatpush2.msra.mxu0 0.0
        %468 = vmatprep.subr.mxu0 0.0
        %469 = vmatpush2.msra.mxu0 0.0
        %470 = vmatprep.subr.mxu0 0.0
        %471 = vmatpush2.msra.mxu0 0.0
        %472 = vmatprep.subr.mxu0 0.0
        %473 = vmatpush2.msra.mxu0 0.0
        %474 = vmatprep.subr.mxu0 0.0
        %475 = vmatpush2.msra.mxu0 0.0
        %476 = vmatprep.mubr.f32.mxu0 0.0
        %477 = vmatmul.mubr.f32.gmra.mxu0 %v410
        %v478 = vpop.f32.mrf.mxu0
        %v479 = vadd.f32 %v406, %v478
        %v480 = vpop.f32.mrf.mxu0
        %481 = vdwg.mxu0
        %v482 = vtanh.pop %v479
        %v483 = vmax.f32 %v482, 0.0
        %vm484 = vcmask 31744
        %485 = vst.msk [vmem:[%s311] sm:$0xff] %vm484, %v483
        %v486 = vlaneseq
        %v487 = vand.u32 %v486, 127
        %v488 = vsel %vm324, %v312, -inf
        %489 = vmax.xlane.f32.xlu0 %v488
        %v490 = vpop.xlane.xlu0 %489
        %vm491 = vcmp.eq.f32.partialorder %v312, %v490
        %v492 = vsel %vm491, %v487, 32
        %v493 = vsel %vm324, %v492, 2147483647
        %v494 = vand.u32 %v493, 65535
        %v495 = vshra.s32 %v493, 16
        %v496 = vcvt.s32.f32 %v494
        %v497 = vcvt.s32.f32 %v495
        %498 = vmin.xlane.f32.xlu0 %v497
        %v499 = vpop.xlane.xlu0 %498
        %vm500 = vcmp.eq.f32.partialorder %v497, %v499
        %v501 = vsel %vm500, %v496, inf
        %502 = vmin.xlane.f32.xlu0 %v501
        %v503 = vpop.xlane.xlu0 %502
        %v504 = vcvt.f32.s32 %v503
        %v505 = vcvt.f32.s32 %v499
        %v506 = vshll.u32 %v505, 16
        %v507 = vadd.s32 %v506, %v504
        %vm508 = vcmp.eq.s32.totalorder %v487, %v507
        %v509 = vsel %vm508, -inf, %v312
        %v510 = vsel %vm324, %v509, -inf
        %511 = vmax.xlane.f32.xlu0 %v510
        %v512 = vpop.xlane.xlu0 %511
        %vm513 = vcmp.eq.f32.partialorder %v509, %v512
        %v514 = vsel %vm513, %v487, 32
        %v515 = vsel %vm324, %v514, 2147483647
        %v516 = vand.u32 %v515, 65535
        %v517 = vshra.s32 %v515, 16
        %v518 = vcvt.s32.f32 %v516
        %v519 = vcvt.s32.f32 %v517
        %520 = vmin.xlane.f32.xlu0 %v519
        %v521 = vpop.xlane.xlu0 %520
        %vm522 = vcmp.eq.f32.partialorder %v519, %v521
        %v523 = vsel %vm522, %v518, inf
        %524 = vmin.xlane.f32.xlu0 %v523
        %v525 = vpop.xlane.xlu0 %524
        %v526 = vcvt.f32.s32 %v525
        %v527 = vcvt.f32.s32 %v521
        %v528 = vshll.u32 %v527, 16
        %v529 = vadd.s32 %v528, %v526
        %vm530 = vcmp.eq.s32.totalorder %v487, %v529
        %v531 = vsel %vm530, -inf, %v509
        %v532 = vsel %vm324, %v531, -inf
        %533 = vmax.xlane.f32.xlu0 %v532
        %v534 = vpop.xlane.xlu0 %533
        %vm535 = vcmp.eq.f32.partialorder %v531, %v534
        %v536 = vsel %vm535, %v487, 32
        %v537 = vsel %vm324, %v536, 2147483647
        %v538 = vand.u32 %v537, 65535
        %v539 = vshra.s32 %v537, 16
        %v540 = vcvt.s32.f32 %v538
        %v541 = vcvt.s32.f32 %v539
        %542 = vmin.xlane.f32.xlu0 %v541
        %v543 = vpop.xlane.xlu0 %542
        %vm544 = vcmp.eq.f32.partialorder %v541, %v543
        %v545 = vsel %vm544, %v540, inf
        %546 = vmin.xlane.f32.xlu0 %v545
        %v547 = vpop.xlane.xlu0 %546
        %v548 = vcvt.f32.s32 %v547
        %v549 = vcvt.f32.s32 %v543
        %v550 = vshll.u32 %v549, 16
        %v551 = vadd.s32 %v550, %v548
        %vm552 = vcmp.gt.s32.totalorder %v507, %v529
        %v553 = vsel %vm552, %v529, %v507
        %v554 = vsel %vm552, %v507, %v529
        %v555 = vsel %vm552, %v512, %v490
        %v556 = vsel %vm552, %v490, %v512
        %vm557 = vcmp.gt.s32.totalorder %v554, %v551
        %v558 = vsel %vm557, %v551, %v554
        %v559 = vsel %vm557, %v534, %v556
        %v560 = vsel %vm557, %v556, %v534
        %vm561 = vcmp.gt.s32.totalorder %v553, %v558
        %v562 = vsel %vm561, %v559, %v555
        %v563 = vsel %vm561, %v555, %v559
        %v564 = vld [vmem:[%s5] sm:$0x7]
        %v565 = vlaneseq
        %v566 = vshrl.u32 %v565, 7
        %v567 = vsub.s32 0, %v566
        %v568 = vrot.slane %v564, %v567
        %v569 = vmul.f32 %v562, %v568
        %v570 = vld [vmem:[%s6] sm:$0x1]
        %v572 = vlaneseq
        %v573 = vshrl.u32 %v572, 7
        %v574 = vsub.s32 0, %v573
        %v575 = vrot.slane %v570, %v574
        %v577 = vadd.f32 %v569, %v575
        %v578 = vlaneseq
        %v579 = vshrl.u32 %v578, 7
        %v580 = vsub.s32 1, %v579
        %v581 = vrot.slane %v564, %v580
        %v582 = vmul.f32 %v563, %v581
        %v583 = vadd.f32 %v577, %v582
        %v584 = vlaneseq
        %v585 = vshrl.u32 %v584, 7
        %v586 = vsub.s32 2, %v585
        %v587 = vrot.slane %v564, %v586
        %v588 = vmul.f32 %v560, %v587
        %v589 = vadd.f32 %v583, %v588
        %vm590 = vcmask 523264
        %591 = vst.msk [vmem:[%s297] sm:$0xff] %vm590, %v589
        %s592 = sand.u32 %s183, 1
        %s593 = scalar_lea.sflag [#allocation3], %s592
        %s594 = sand.u32 %s183, 1
        %s595 = smul.addr %s594, 8
        %s596 = scalar_lea.vmem [#allocation2], %s595
        %p597 = scmp.lt.s32.totalorder %s23, 1
        %s598 = scalar_select %p597, %s23, 1
        %s599 = smul.addr %s598, 8
        %s600 = scalar_lea.vmem %s8, %s599
        // Predicated region
        $region49: #{tpu_custom_call.1} parent=47 // pred_check
          %p601 = pneg %p193
        $region50: #{tpu_custom_call.1} parent=47 // pred_check_branch
          %603 = sbr.rel (%p601) target = $region52
        $region51: #{tpu_custom_call.1} parent=47 // pred_region
          %s605 = ssub.s32 128, 128
          %606 = vsyncadd %s593, %s605
          %s607 = smul.addr %s23, 128
          %s608 = scalar_lea.hbm %s7, %s607
          %s610 = sshll.u32 %s596, 4
          %s611 = int_to_ptr.vmem [resolvable:$true] %s610
          %613 = dma.vmem_to_hbm [thread:$0]  %s611, 128, %s608, %s593
        $region52: #{tpu_custom_call.1} parent=47 // pred_fallthru
          _
        // Predicated region
        $region53: #{tpu_custom_call.1} parent=47 // pred_check
          %p614 = pneg %p219
        $region54: #{tpu_custom_call.1} parent=47 // pred_check_branch
          %616 = sbr.rel (%p614) target = $region56
        $region55: #{tpu_custom_call.1} parent=47 // pred_region
          _
        $region56: #{tpu_custom_call.1} parent=47 // pred_fallthru
          _
      $region48: #{tpu_custom_call.1} parent=5 // pred_fallthru
        _
      %p617 = scmp.le.s32.totalorder 2, %s18
      // Predicated region
      $region57: #{tpu_custom_call.1} parent=5 // pred_check
        %p618 = pneg %p617
      $region58: #{tpu_custom_call.1} parent=5 // pred_check_branch
        %620 = sbr.rel (%p618) target = $region60
      $region59: #{tpu_custom_call.1} parent=5 // pred_region
        %s621 = ssub.s32 %s18, 2
        // Predicated region
        $region61: #{tpu_custom_call.1} parent=59 // pred_check
          %p622 = pneg %p199
        $region62: #{tpu_custom_call.1} parent=59 // pred_check_branch
          %624 = sbr.rel (%p622) target = $region64
        $region63: #{tpu_custom_call.1} parent=59 // pred_region
          %s625 = sand.u32 %s184, 1
          %s626 = scalar_lea.sflag [#allocation3], %s625
          %s627 = sand.u32 %s184, 1
          %s628 = smul.addr %s627, 8
          %s629 = scalar_lea.vmem [#allocation2], %s628
          %630 = dma.done %s626, 128
        $region64: #{tpu_custom_call.1} parent=59 // pred_fallthru
          _
        // Predicated region
        $region65: #{tpu_custom_call.1} parent=59 // pred_check
          %p631 = pneg %p225
        $region66: #{tpu_custom_call.1} parent=59 // pred_check_branch
          %633 = sbr.rel (%p631) target = $region68
        $region67: #{tpu_custom_call.1} parent=59 // pred_region
          %p634 = scmp.lt.s32.totalorder %s24, 1
          %s635 = scalar_select %p634, %s24, 1
          %s636 = smul.addr %s635, 8
          %s637 = scalar_lea.vmem %s8, %s636
        $region68: #{tpu_custom_call.1} parent=59 // pred_fallthru
          _
      $region60: #{tpu_custom_call.1} parent=5 // pred_fallthru
        _
    $region6: #{tpu_custom_call.1} parent=1 // loop_footer
      %s22 = sadd.s32 1, %s18
    $region7: #{tpu_custom_call.1} parent=1 // loop_footer_branch
      %17 = sbr.rel target = $region3
    $region8: #{tpu_custom_call.1} parent=1 // loop_exit
      _
    %638 = vsyncpa [#allocation3], 1
    %s639 = scalar_lea.sflag [#allocation3], 1
    %640 = vsyncpa %s639, 1

</llo_original>
